<compile_context>
chip_gen: v7x
topology: tpu7x:2x2x1
jax: 0.10.0
libtpu: 0.0.40
codegen_flags: <defaults>
</compile_context>

<pallas_src>
import jax
import jax.numpy as jnp
from jax import lax
from jax.experimental import pallas as pl
from jax.experimental.pallas import tpu as pltpu


# ------------------------------ kernel bodies ---------------------------------
def _pool_pad_kernel(x_ref, b_ref, o_ref):
    """Even-H branch: per-batch MXU dot against the small separable pooling
    matrix B, then channel zero-pad, one full-slab store per batch element.

    x_ref: (nb, in_c*Ho, k*W)   b_ref: (k*W, Wo)   o_ref: (nb, out_c*Ho, Wo)
    """
    nb = x_ref.shape[0]
    in_rows = x_ref.shape[1]
    out_rows = o_ref.shape[1]
    wo = o_ref.shape[2]
    bmat = b_ref[...]
    if out_rows > in_rows:                       # hoisted: don't rebuild per iter
        zpad = jnp.zeros((out_rows - in_rows, wo), jnp.float32)
    for b in range(nb):                          # static unroll: nb dots per step
        pooled = jnp.dot(x_ref[b], bmat, preferred_element_type=jnp.float32)
        if out_rows > in_rows:
            pooled = jnp.concatenate([pooled, zpad], axis=0)
        o_ref[b] = pooled.astype(o_ref.dtype)    # single full-slab store


def _pad_only_kernel(x_ref, o_ref):
    """Odd-H branch: input is already strided-subsampled by the wrapper, so the
    kernel only does the channel zero-pad (lane-dense Ho*Wo layout).

    x_ref: (nb, in_c, Ho*Wo)   o_ref: (nb, out_c, Ho*Wo)
    """
    nb, in_c = x_ref.shape[0], x_ref.shape[1]
    out_c, s = o_ref.shape[1], o_ref.shape[2]
    if out_c > in_c:
        zpad = jnp.zeros((out_c - in_c, s), o_ref.dtype)
    for b in range(nb):
        val = x_ref[b].astype(o_ref.dtype)
        if out_c > in_c:
            val = jnp.concatenate([val, zpad], axis=0)
        o_ref[b] = val                           # single full-slab store


# ------------------------------ wrapper (JAX) ----------------------------------
def _pick_batch_block(n, rows_per_step, target_rows=512):
    """Largest divisor nb of n with nb*rows_per_step <= target_rows, keeping at
    least 2 grid steps when n >= 2 (v7x has 2 TensorCores sharing HBM)."""
    best = 1
    for nb in range(1, n + 1):
        if n % nb != 0:
            continue
        if n > 1 and n // nb < 2:
            continue
        if nb * rows_per_step <= target_rows:
            best = nb
    return best


def avg_pool_shortcut_forward(x, stride, out_c):
    """AvgPoolShortCut.forward: x (N, in_c, H, W) -> (N, out_c, Ho, Wo)."""
    N, in_c, H, W = x.shape
    assert out_c >= in_c

    if H % 2 != 0:
        # F.avg_pool2d(x, 1, stride): pure strided subsample -> pad-only kernel.
        ho = (H - 1) // stride + 1
        wo = (W - 1) // stride + 1
        x_sub = x[:, :, ::stride, ::stride].reshape(N, in_c, ho * wo)
        nb = _pick_batch_block(N, out_c)
        y = pl.pallas_call(
            _pad_only_kernel,
            out_shape=jax.ShapeDtypeStruct((N, out_c, ho * wo), x.dtype),
            grid_spec=pltpu.PrefetchScalarGridSpec(
                num_scalar_prefetch=0,
                grid=(N // nb,),
                in_specs=[pl.BlockSpec((nb, in_c, ho * wo), lambda i: (i, 0, 0))],
                out_specs=pl.BlockSpec((nb, out_c, ho * wo), lambda i: (i, 0, 0)),
            ),
            compiler_params=pltpu.CompilerParams(
                dimension_semantics=("parallel",)),
        )(x_sub)
        return y.reshape(N, out_c, ho, wo)

    # Even-H: F.avg_pool2d(x, stride, stride)  (VALID windows).
    k = stride
    ho = (H - k) // k + 1
    wo = (W - k) // k + 1
    hk, wk = ho * k, wo * k
    if (hk, wk) != (H, W):                       # VALID pooling drops trailing rows/cols
        x = x[:, :, :hk, :wk]
    # Free contiguous reshape: row r = c*Ho + ho_idx, lane j = dh*Wk + w.
    x2 = x.reshape(N, in_c * ho, k * wk)

    # Separable pooling matrix B (k*Wk, Wo), f32, with 1/k^2 folded in:
    # B[dh*Wk + w, o] = 1/k^2  iff  o*k <= w < o*k + k.
    w_idx = jnp.arange(wk)[:, None]
    o_idx = jnp.arange(wo)[None, :]
    pw = ((w_idx >= o_idx * k) & (w_idx < o_idx * k + k)).astype(jnp.float32)
    bmat = jnp.tile(pw / float(k * k), (k, 1))   # (k*Wk, Wo), a few KB at most

    nb = _pick_batch_block(N, out_c * ho)
    y = pl.pallas_call(
        _pool_pad_kernel,
        out_shape=jax.ShapeDtypeStruct((N, out_c * ho, wo), x.dtype),
        grid_spec=pltpu.PrefetchScalarGridSpec(
            num_scalar_prefetch=0,
            grid=(N // nb,),
            in_specs=[
                pl.BlockSpec((nb, in_c * ho, k * wk), lambda i: (i, 0, 0)),
                pl.BlockSpec((k * wk, wo), lambda i: (0, 0)),
            ],
            out_specs=pl.BlockSpec((nb, out_c * ho, wo), lambda i: (i, 0, 0)),
        ),
        compiler_params=pltpu.CompilerParams(
            dimension_semantics=("parallel",)),
    )(x2, bmat)
    return y.reshape(N, out_c, ho, wo)


# ---------------------------- reference (sanity) -------------------------------
def reference_forward(x, stride, out_c):
    N, in_c, H, W = x.shape
    kernel = 1 if (H % 2 != 0) else stride
    summed = lax.reduce_window(
        x, 0.0, lax.add,
        window_dimensions=(1, 1, kernel, kernel),
        window_strides=(1, 1, stride, stride),
        padding="VALID")
    y = summed / float(kernel * kernel)
    pad = jnp.zeros((N, out_c - in_c, y.shape[2], y.shape[3]), y.dtype)
    return jnp.concatenate([y, pad], axis=1)


# ----------------------------------- main ---------------------------------------
if __name__ == "__main__":
    # Module config: AvgPoolShortCut(stride=2, out_c=8, in_c=4)
    stride, in_c, out_c = 2, 4, 8
    N, H, W = 2, 16, 16

    key = jax.random.PRNGKey(0)
    k_even, k_odd = jax.random.split(key)

    # Even-H branch: avg_pool2d(x, stride, stride) + channel pad.
    x_even = jax.random.normal(k_even, (N, in_c, H, W), dtype=jnp.float32)
    y_even = jax.block_until_ready(avg_pool_shortcut_forward(x_even, stride, out_c))
    ref_even = reference_forward(x_even, stride, out_c)
    assert y_even.shape == (N, out_c, H // stride, W // stride)
    assert jnp.allclose(y_even, ref_even, atol=1e-5, rtol=1e-5)

    # Odd-H branch: avg_pool2d(x, 1, stride) (strided subsample) + channel pad.
    x_odd = jax.random.normal(k_odd, (N, in_c, H - 1, W - 1), dtype=jnp.float32)
    y_odd = jax.block_until_ready(avg_pool_shortcut_forward(x_odd, stride, out_c))
    ref_odd = reference_forward(x_odd, stride, out_c)
    assert y_odd.shape == ref_odd.shape
    assert jnp.allclose(y_odd, ref_odd, atol=1e-5, rtol=1e-5)

    print("KERNEL_OK")
</pallas_src>

<mosaic_0001>
module attributes {stable_mosaic.version = 11 : i64} {
  func.func @_pool_pad_kernel(%arg0: i32, %arg1: memref<1x32x32xf32, #tpu.memory_space<vmem>>, %arg2: memref<32x8xf32, #tpu.memory_space<vmem>>, %arg3: memref<1x64x8xf32, #tpu.memory_space<vmem>>) attributes {dimension_semantics = [#tpu.dimension_semantics<parallel>], iteration_bounds = array<i64: 2>, scalar_prefetch = 0 : i64, scratch_operands = 0 : i64, tpu.core_type = #tpu.core_type<tc>, window_params = [{transform_indices = @transform_0, window_bounds = array<i64: 1, 32, 32>}, {pipeline_mode = #tpu.pipeline_mode<synchronous>, transform_indices = @transform_1, window_bounds = array<i64: 32, 8>}, {transform_indices = @transform_2, window_bounds = array<i64: 1, 64, 8>}]} {
    %c0 = arith.constant 0 : index
    %c0_0 = arith.constant 0 : index
    %0 = vector.load %arg2[%c0, %c0_0] : memref<32x8xf32, #tpu.memory_space<vmem>>, vector<32x8xf32>
    %cst = arith.constant 0.000000e+00 : f32
    %1 = vector.broadcast %cst : f32 to vector<32x8xf32>
    %c0_1 = arith.constant 0 : index
    %c0_2 = arith.constant 0 : index
    %c0_3 = arith.constant 0 : index
    %2 = vector.load %arg1[%c0_1, %c0_2, %c0_3] : memref<1x32x32xf32, #tpu.memory_space<vmem>>, vector<1x32x32xf32>
    %3 = vector.shape_cast %2 : vector<1x32x32xf32> to vector<32x32xf32>
    %cst_4 = arith.constant dense<0.000000e+00> : vector<32x8xf32>
    %4 = tpu.matmul %3, %0, %cst_4 {dimension_numbers = #tpu.dot_dimension_numbers<[1], [0], [0], [1], [0, 0, 1, 1], [], []>} : vector<32x32xf32>, vector<32x8xf32>, vector<32x8xf32> -> vector<32x8xf32>
    %5 = tpu.concatenate %4, %1 in 0 : vector<32x8xf32>, vector<32x8xf32> -> vector<64x8xf32>
    %c0_5 = arith.constant 0 : index
    %c0_6 = arith.constant 0 : index
    %c0_7 = arith.constant 0 : index
    %6 = vector.load %arg3[%c0_5, %c0_6, %c0_7] : memref<1x64x8xf32, #tpu.memory_space<vmem>>, vector<1x64x8xf32>
    %7 = vector.shape_cast %6 : vector<1x64x8xf32> to vector<64x8xf32>
    %8 = vector.shape_cast %5 : vector<64x8xf32> to vector<1x64x8xf32>
    tpu.vector_store %arg3[%c0_5, %c0_6, %c0_7], %8 {strides = array<i32>} : memref<1x64x8xf32, #tpu.memory_space<vmem>>, vector<1x64x8xf32>,
    return
  }
  func.func @transform_0(%arg0: i32) -> (i32, i32, i32) {
    %c0_i32 = arith.constant 0 : i32
    %c0_i32_0 = arith.constant 0 : i32
    %c0_i32_1 = arith.constant 0 : i32
    return %arg0, %c0_i32, %c0_i32_0 : i32, i32, i32
  }
  func.func @transform_1(%arg0: i32) -> (i32, i32) {
    %c0_i32 = arith.constant 0 : i32
    %c0_i32_0 = arith.constant 0 : i32
    %c0_i32_1 = arith.constant 0 : i32
    return %c0_i32, %c0_i32_0 : i32, i32
  }
  func.func @transform_2(%arg0: i32) -> (i32, i32, i32) {
    %c0_i32 = arith.constant 0 : i32
    %c0_i32_0 = arith.constant 0 : i32
    %c0_i32_1 = arith.constant 0 : i32
    return %arg0, %c0_i32, %c0_i32_0 : i32, i32, i32
  }
}

</mosaic_0001>

<llo_original>
// kernel: tpu_custom_call.1
$region0: #{tpu_custom_call.1}
  #allocation0 [shape = 'u32[]', space=smem, size = 0x4, offset = 0x4, fixed_abs, tag = 'smem constant byte address 0x4 - core index']
  #allocation1 [shape = 'u32[144,128]{1,0:T(1,128)}', space=vmem, size = 0x12000, scoped, tag = 'internal scratch']
  %s0 = inlined_call_operand.hbm [shape: f32[2,32,32], index: 0, kind: input, shape index: {}]
  %s1 = inlined_call_operand.vmem [shape: f32[32,8], index: 1, kind: input, shape index: {}]
  %s2 = inlined_call_operand.vmem [shape: f32[2,64,8], index: 2, kind: output, shape index: {}]
  %s3 = sld [smem:[#allocation0]]
  $region45: #{tpu_custom_call.1} parent=0
    _
  %s5 = ssub.s32 1, %s3
  %s6 = scalar_select 0, %s5, %s3
  $region1: #{tpu_custom_call.1} parent=0
    #allocation2 [shape = 'u8[32768]{0}', space=vmem, size = 0x8000, scoped, tag = 'input window, operand 0']
    #allocation3 [shape = 's32[2]{0}', space=sflag, size = 0x8, scoped, tag = 'scoped memory for tpu_custom_call.1']
    %7 = vsyncpa [#allocation3], 0
    %s8 = scalar_lea.sflag [#allocation3], 1
    %9 = vsyncpa %s8, 0
    loop: start=0, step=1, limit=4
    $region2: #{tpu_custom_call.1} parent=1 // loop_pre_header
      _
    $region3: #{tpu_custom_call.1} parent=1 // loop_header
      %s11 = sphi 0, %s15
      %p12 = scmp.ge.s32.totalorder %s11, 4
      %s21 = sphi 0, %s23
      %s24 = sphi 0, %s21
      %s25 = sphi 0, %s24
      %s41 = sphi 0, %s25
      %s45 = sphi 0, %s45
      %s47 = sphi 0, %s45
      %s48 = sphi 0, %s47
      %s62 = sphi 0, %s48
      %s68 = sphi 0, %s70
      %s71 = sphi 0, %s68
      %s72 = sphi 0, %s71
      %s88 = sphi 0, %s72
    $region4: #{tpu_custom_call.1} parent=1 // loop_header_branch
      %14 = sbr.rel (%p12) target = $region8
    $region5: #{tpu_custom_call.1} parent=1 // loop_body
      %s16 = ssub.s32 %s11, 1
      %s17 = ssub.s32 %s11, 2
      %s18 = sadd.s32 %s11, 1
      %s19 = ssub.s32 %s11, %s18
      %p20 = scmp.eq.s32.totalorder %s19, 0
      %s22 = sadd.s32 %s21, 1
      %s23 = scalar_select %p20, %s21, %s22
      %p26 = pneg %p20
      %p27 = scmp.eq.s32.totalorder %s11, 1
      %p28 = por %p26, %p27
      %p29 = scmp.ne.s32.totalorder %s21, %s24
      %p30 = scmp.eq.s32.totalorder %s11, 0
      %p31 = por %p29, %p30
      %p32 = scmp.ne.s32.totalorder %s21, %s24
      %p33 = scmp.eq.s32.totalorder %s16, 1
      %p34 = por %p32, %p33
      %p35 = scmp.ne.s32.totalorder %s24, %s25
      %p36 = scmp.eq.s32.totalorder %s16, 0
      %p37 = por %p35, %p36
      %p38 = scmp.ne.s32.totalorder %s24, %s25
      %p39 = scmp.eq.s32.totalorder %s17, 1
      %p40 = por %p38, %p39
      %p42 = scmp.ne.s32.totalorder %s25, %s41
      %p43 = scmp.eq.s32.totalorder %s17, 0
      %p44 = por %p42, %p43
      %s46 = sadd.s32 %s45, 1
      %p49 = scmp.eq.s32.totalorder %s11, 1
      %p50 = scmp.ne.s32.totalorder %s45, %s47
      %p51 = scmp.eq.s32.totalorder %s11, 0
      %p52 = por %p50, %p51
      %p53 = scmp.ne.s32.totalorder %s45, %s47
      %p54 = scmp.eq.s32.totalorder %s16, 1
      %p55 = por %p53, %p54
      %p56 = scmp.ne.s32.totalorder %s47, %s48
      %p57 = scmp.eq.s32.totalorder %s16, 0
      %p58 = por %p56, %p57
      %p59 = scmp.ne.s32.totalorder %s47, %s48
      %p60 = scmp.eq.s32.totalorder %s17, 1
      %p61 = por %p59, %p60
      %p63 = scmp.ne.s32.totalorder %s48, %s62
      %p64 = scmp.eq.s32.totalorder %s17, 0
      %p65 = por %p63, %p64
      %s66 = ssub.s32 %s11, %s18
      %p67 = scmp.eq.s32.totalorder %s66, 0
      %s69 = sadd.s32 %s68, 1
      %s70 = scalar_select %p67, %s68, %s69
      %p73 = pneg %p67
      %p74 = scmp.eq.s32.totalorder %s11, 1
      %p75 = por %p73, %p74
      %p76 = scmp.ne.s32.totalorder %s68, %s71
      %p77 = scmp.eq.s32.totalorder %s11, 0
      %p78 = por %p76, %p77
      %p79 = scmp.ne.s32.totalorder %s68, %s71
      %p80 = scmp.eq.s32.totalorder %s16, 1
      %p81 = por %p79, %p80
      %p82 = scmp.ne.s32.totalorder %s71, %s72
      %p83 = scmp.eq.s32.totalorder %s16, 0
      %p84 = por %p82, %p83
      %p85 = scmp.ne.s32.totalorder %s71, %s72
      %p86 = scmp.eq.s32.totalorder %s17, 1
      %p87 = por %p85, %p86
      %p89 = scmp.ne.s32.totalorder %s72, %s88
      %p90 = scmp.eq.s32.totalorder %s17, 0
      %p91 = por %p89, %p90
      %p92 = scmp.le.s32.totalorder 1, %s11
      %p93 = scmp.lt.s32.totalorder %s11, 3
      %p94 = pnand %p92, %p93
      %p95 = pneg %p94
      // Predicated region
      $region9: #{tpu_custom_call.1} parent=5 // pred_check
        _
      $region10: #{tpu_custom_call.1} parent=5 // pred_check_branch
        %97 = sbr.rel (%p94) target = $region12
      $region11: #{tpu_custom_call.1} parent=5 // pred_region
        %s98 = ssub.s32 %s11, 1
        // Predicated region
        $region13: #{tpu_custom_call.1} parent=11 // pred_check
          %p99 = pneg %p58
        $region14: #{tpu_custom_call.1} parent=11 // pred_check_branch
          %101 = sbr.rel (%p99) target = $region16
        $region15: #{tpu_custom_call.1} parent=11 // pred_region
          _
        $region16: #{tpu_custom_call.1} parent=11 // pred_fallthru
          _
      $region12: #{tpu_custom_call.1} parent=5 // pred_fallthru
        _
      %p102 = scmp.lt.s32.totalorder %s11, 2
      // Predicated region
      $region17: #{tpu_custom_call.1} parent=5 // pred_check
        %p103 = pneg %p102
      $region18: #{tpu_custom_call.1} parent=5 // pred_check_branch
        %105 = sbr.rel (%p103) target = $region20
      $region19: #{tpu_custom_call.1} parent=5 // pred_region
        // Predicated region
        $region21: #{tpu_custom_call.1} parent=19 // pred_check
          %p106 = pneg %p31
        $region22: #{tpu_custom_call.1} parent=19 // pred_check_branch
          %108 = sbr.rel (%p106) target = $region24
        $region23: #{tpu_custom_call.1} parent=19 // pred_region
          %s109 = sand.u32 %s21, 1
          %s110 = scalar_lea.sflag [#allocation3], %s109
          %s111 = sand.u32 %s21, 1
          %s112 = smul.addr %s111, 32
          %s113 = scalar_lea.vmem [#allocation2], %s112
          %s115 = ssub.s32 512, 512
          %116 = vsyncadd %s110, %s115
          %s117 = smul.addr %s11, 4
          %s118 = smul.addr %s117, 128
          %s119 = scalar_lea.hbm %s0, %s118
          %s120 = sshll.u32 %s113, 4
          %s121 = int_to_ptr.vmem [resolvable:$true] %s120
          %126 = dma.hbm_to_vmem [thread:$0]  %s119, 512, %s121, %s110, 128, 128, 8
        $region24: #{tpu_custom_call.1} parent=19 // pred_fallthru
          _
      $region20: #{tpu_custom_call.1} parent=5 // pred_fallthru
        _
      %p127 = scmp.le.s32.totalorder 1, %s11
      %p128 = scmp.lt.s32.totalorder %s11, 3
      %p129 = pnand %p127, %p128
      %p130 = pneg %p129
      // Predicated region
      $region25: #{tpu_custom_call.1} parent=5 // pred_check
        _
      $region26: #{tpu_custom_call.1} parent=5 // pred_check_branch
        %132 = sbr.rel (%p129) target = $region28
      $region27: #{tpu_custom_call.1} parent=5 // pred_region
        %s133 = ssub.s32 %s11, 1
        %s134 = sand.u32 %s24, 1
        %s135 = scalar_lea.sflag [#allocation3], %s134
        %s136 = sand.u32 %s24, 1
        %s137 = smul.addr %s136, 32
        %s138 = scalar_lea.vmem [#allocation2], %s137
        // Predicated region
        $region29: #{tpu_custom_call.1} parent=27 // pred_check
          %p139 = pneg %p37
        $region30: #{tpu_custom_call.1} parent=27 // pred_check_branch
          %141 = sbr.rel (%p139) target = $region32
        $region31: #{tpu_custom_call.1} parent=27 // pred_region
          %142 = dma.done %s135, 512
        $region32: #{tpu_custom_call.1} parent=27 // pred_fallthru
          _
        %s143 = sand.u32 %s24, 1
        %s144 = scalar_lea.sflag [#allocation3], %s143
        %s145 = sand.u32 %s24, 1
        %s146 = smul.addr %s145, 32
        %s147 = scalar_lea.vmem [#allocation2], %s146
        %p148 = pneg %p37
        %p149 = pneg %p34
        %p150 = pneg %p58
        %p151 = pneg %p55
        %p152 = pneg %p84
        %p153 = pneg %p81
        %p154 = scmp.lt.s32.totalorder %s16, 1
        %s155 = scalar_select %p154, %s16, 1
        %s156 = smul.addr %s155, 8
        %s157 = smul.addr %s156, 8
        %s158 = scalar_lea.vmem %s2, %s157
        %p159 = scmp.lt.s32.totalorder %s16, 1
        %s160 = scalar_select %p159, %s16, 1
        %s161 = smul.addr %s160, 8
        %s162 = smul.addr %s161, 8
        %s163 = scalar_lea.vmem %s2, %s162
        %v164 = vld [vmem:[%s1] sm:$0xff]
        %v165 = vld [vmem:[%s1 + $0x8] sm:$0xff]
        %v166 = vld [vmem:[%s1 + $0x10] sm:$0xff]
        %v167 = vld [vmem:[%s1 + $0x18] sm:$0xff]
        %v168 = vld [vmem:[%s138] sm:$0xff]
        %v169 = vld [vmem:[%s138 + $0x8] sm:$0xff]
        %v170 = vld [vmem:[%s138 + $0x10] sm:$0xff]
        %v171 = vld [vmem:[%s138 + $0x18] sm:$0xff]
        %vm172 = vcmask 261120
        %v174 = vsel %vm172, %v168, 0
        %v177 = vsel %vm172, %v169, 0
        %v180 = vsel %vm172, %v170, 0
        %v183 = vsel %vm172, %v171, 0
        %185 = vmatprep.subr.mxu0 0.0
        %186 = vmatpush1.msra.mxu0 %v164
        %187 = vmatprep.subr.mxu0 0.0
        %188 = vmatpush1.msra.mxu0 %v165
        %189 = vmatprep.subr.mxu0 0.0
        %190 = vmatpush1.msra.mxu0 %v166
        %191 = vmatprep.subr.mxu0 0.0
        %192 = vmatpush1.msra.mxu0 %v167
        %193 = vmatprep.subr.mxu0 0.0
        %194 = vmatpush1.msra.mxu0 0.0
        %195 = vmatprep.subr.mxu0 0.0
        %196 = vmatpush1.msra.mxu0 0.0
        %197 = vmatprep.subr.mxu0 0.0
        %198 = vmatpush1.msra.mxu0 0.0
        %199 = vmatprep.subr.mxu0 0.0
        %200 = vmatpush1.msra.mxu0 0.0
        %201 = vmatprep.subr.mxu0 0.0
        %202 = vmatpush1.msra.mxu0 0.0
        %203 = vmatprep.subr.mxu0 0.0
        %204 = vmatpush1.msra.mxu0 0.0
        %205 = vmatprep.subr.mxu0 0.0
        %206 = vmatpush1.msra.mxu0 0.0
        %207 = vmatprep.subr.mxu0 0.0
        %208 = vmatpush1.msra.mxu0 0.0
        %209 = vmatprep.subr.mxu0 0.0
        %210 = vmatpush1.msra.mxu0 0.0
        %211 = vmatprep.subr.mxu0 0.0
        %212 = vmatpush1.msra.mxu0 0.0
        %213 = vmatprep.subr.mxu0 0.0
        %214 = vmatpush1.msra.mxu0 0.0
        %215 = vmatprep.subr.mxu0 0.0
        %216 = vmatpush1.msra.mxu0 0.0
        %217 = vmatprep.subr.mxu0 0.0
        %218 = vmatpush1.msra.mxu0 0.0
        %219 = vmatprep.subr.mxu0 0.0
        %220 = vmatpush1.msra.mxu0 0.0
        %221 = vmatprep.subr.mxu0 0.0
        %222 = vmatpush1.msra.mxu0 0.0
        %223 = vmatprep.subr.mxu0 0.0
        %224 = vmatpush1.msra.mxu0 0.0
        %225 = vmatprep.subr.mxu0 0.0
        %226 = vmatpush1.msra.mxu0 0.0
        %227 = vmatprep.subr.mxu0 0.0
        %228 = vmatpush1.msra.mxu0 0.0
        %229 = vmatprep.subr.mxu0 0.0
        %230 = vmatpush1.msra.mxu0 0.0
        %231 = vmatprep.subr.mxu0 0.0
        %232 = vmatpush1.msra.mxu0 0.0
        %233 = vmatprep.subr.mxu0 0.0
        %234 = vmatpush1.msra.mxu0 0.0
        %235 = vmatprep.subr.mxu0 0.0
        %236 = vmatpush1.msra.mxu0 0.0
        %237 = vmatprep.subr.mxu0 0.0
        %238 = vmatpush1.msra.mxu0 0.0
        %239 = vmatprep.subr.mxu0 0.0
        %240 = vmatpush1.msra.mxu0 0.0
        %241 = vmatprep.subr.mxu0 0.0
        %242 = vmatpush1.msra.mxu0 0.0
        %243 = vmatprep.subr.mxu0 0.0
        %244 = vmatpush1.msra.mxu0 0.0
        %245 = vmatprep.subr.mxu0 0.0
        %246 = vmatpush1.msra.mxu0 0.0
        %247 = vmatprep.subr.mxu0 0.0
        %248 = vmatpush1.msra.mxu0 0.0
        %249 = vmatprep.mubr.f32.mxu0 0.0
        %250 = vmatmul.mubr.f32.gmra.mrb[0].mxu0 %v174
        %v251 = vpop.f32.mrb[0].mxu0
        %v252 = vadd.f32 0.0, %v251
        %v253 = vpop.f32.mrb[0].mxu0
        %254 = vmatprep.mubr.f32.mxu0 0.0
        %255 = vmatmul.mubr.f32.gmra.mrb[0].mxu0 %v177
        %v256 = vpop.f32.mrb[0].mxu0
        %v257 = vadd.f32 0.0, %v256
        %v258 = vpop.f32.mrb[0].mxu0
        %259 = vmatprep.mubr.f32.mxu0 0.0
        %260 = vmatmul.mubr.f32.gmra.mrb[0].mxu0 %v180
        %v261 = vpop.f32.mrb[0].mxu0
        %v262 = vadd.f32 0.0, %v261
        %v263 = vpop.f32.mrb[0].mxu0
        %264 = vmatprep.mubr.f32.mxu0 0.0
        %265 = vmatmul.mubr.f32.gmra.mrb[0].mxu0 %v183
        %v266 = vpop.f32.mrb[0].mxu0
        %v267 = vadd.f32 0.0, %v266
        %v268 = vpop.f32.mrb[0].mxu0
        %269 = vdwg.mxu0
        %vm270 = vcmask 64512
        %271 = vst.msk [vmem:[%s163] sm:$0xff] %vm270, %v252
        %272 = vst.msk [vmem:[%s163 + $0x8] sm:$0xff] %vm270, %v257
        %273 = vst.msk [vmem:[%s163 + $0x10] sm:$0xff] %vm270, %v262
        %274 = vst.msk [vmem:[%s163 + $0x18] sm:$0xff] %vm270, %v267
        %275 = vst.msk [vmem:[%s163 + $0x20] sm:$0xff] %vm270, 0.0
        %276 = vst.msk [vmem:[%s163 + $0x28] sm:$0xff] %vm270, 0.0
        %277 = vst.msk [vmem:[%s163 + $0x30] sm:$0xff] %vm270, 0.0
        %278 = vst.msk [vmem:[%s163 + $0x38] sm:$0xff] %vm270, 0.0
        %p279 = scmp.lt.s32.totalorder %s16, 1
        %s280 = scalar_select %p279, %s16, 1
        %s281 = smul.addr %s280, 8
        %s282 = smul.addr %s281, 8
        %s283 = scalar_lea.vmem %s2, %s282
        // Predicated region
        $region33: #{tpu_custom_call.1} parent=27 // pred_check
          %p284 = pneg %p81
        $region34: #{tpu_custom_call.1} parent=27 // pred_check_branch
          %286 = sbr.rel (%p284) target = $region36
        $region35: #{tpu_custom_call.1} parent=27 // pred_region
          _
        $region36: #{tpu_custom_call.1} parent=27 // pred_fallthru
          _
      $region28: #{tpu_custom_call.1} parent=5 // pred_fallthru
        _
      %p287 = scmp.le.s32.totalorder 2, %s11
      // Predicated region
      $region37: #{tpu_custom_call.1} parent=5 // pred_check
        %p288 = pneg %p287
      $region38: #{tpu_custom_call.1} parent=5 // pred_check_branch
        %290 = sbr.rel (%p288) target = $region40
      $region39: #{tpu_custom_call.1} parent=5 // pred_region
        %s291 = ssub.s32 %s11, 2
        // Predicated region
        $region41: #{tpu_custom_call.1} parent=39 // pred_check
          %p292 = pneg %p87
        $region42: #{tpu_custom_call.1} parent=39 // pred_check_branch
          %294 = sbr.rel (%p292) target = $region44
        $region43: #{tpu_custom_call.1} parent=39 // pred_region
          %p295 = scmp.lt.s32.totalorder %s17, 1
          %s296 = scalar_select %p295, %s17, 1
          %s297 = smul.addr %s296, 8
          %s298 = smul.addr %s297, 8
          %s299 = scalar_lea.vmem %s2, %s298
        $region44: #{tpu_custom_call.1} parent=39 // pred_fallthru
          _
      $region40: #{tpu_custom_call.1} parent=5 // pred_fallthru
        _
    $region6: #{tpu_custom_call.1} parent=1 // loop_footer
      %s15 = sadd.s32 1, %s11
    $region7: #{tpu_custom_call.1} parent=1 // loop_footer_branch
      %10 = sbr.rel target = $region3
    $region8: #{tpu_custom_call.1} parent=1 // loop_exit
      _
    %300 = vsyncpa [#allocation3], 1
    %s301 = scalar_lea.sflag [#allocation3], 1
    %302 = vsyncpa %s301, 1

</llo_original>
